<compile_context>
chip_gen: v7x
topology: tpu7x:2x2x1
jax: 0.10.0
libtpu: 0.0.40
codegen_flags: <defaults>
</compile_context>

<pallas_src>
import functools

import jax
import jax.numpy as jnp
import numpy as np
from jax import lax
from jax.experimental import pallas as pl
from jax.experimental.pallas import tpu as pltpu

_LANES = 128          # TPU vreg lane width
_HALO_ROWS = 32       # halo block rows; 32 satisfies f32/bf16/int8 sublane tiling
_R_TILE_MAX = 2048    # packed rows per grid step: 2048*128*4 B = 1 MiB per f32 buffer
_INT32_MIN = -(2 ** 31)


def _round_up(x: int, m: int) -> int:
    return ((x + m - 1) // m) * m


def _make_ctc_kernel(*, blank: int, num_labels: int, l_pad: int, p: int,
                     r_tile: int, t_valid: int, fused: bool):
    """Builds the per-tile kernel.

    Packed layout: packed[r, s * l_pad + l] = emission[r * p + s, l]
      r: packed row (sublane axis), s: timestep-within-row, l: label (lane segment).
    """
    log2_lpad = l_pad.bit_length() - 1
    shifts = [1 << k for k in range(log2_lpad)]          # 1, 2, ..., l_pad // 2

    def roll_up(x, s):                                    # x[..., lane + s]
        return pltpu.roll(x, shift=_LANES - s, axis=1)

    def roll_prev(x, s):                                  # x[..., lane - s]
        s = s % _LANES
        return x if s == 0 else pltpu.roll(x, shift=s, axis=1)

    def make_iotas(rows):
        lane = lax.broadcasted_iota(jnp.int32, (rows, _LANES), 1)
        label = lane & (l_pad - 1)                        # label inside the timestep segment
        masks = [(label + s) < l_pad for s in shifts]     # hoisted; reused by every step
        return lane, label, masks

    def seg_argmax(vals, label, masks):
        """First-max label of every l_pad-lane timestep segment.

        Valid at segment-start lanes (label == 0); other lanes hold partial suffix
        results that no consumer reads.
        TODO(synk): NaN logits follow IEEE compare semantics, which may differ from torch.
        """
        if fused:
            # Pack (sortable 16-bit-float value | inverted label) into one int32 key so a
            # single masked suffix max-reduce (1 roll/step) does argmax + first-index
            # tie-break at once.  Exact: the f32 image of a bf16/f16 value has >= 13 low
            # zero mantissa bits, so clearing the low log2(l_pad) bits preserves ordering.
            bits = pltpu.bitcast(vals.astype(jnp.float32), jnp.int32)
            key = jnp.where(bits < 0, bits ^ jnp.int32(0x7FFFFFFF), bits)   # signed-sortable
            key = (key & jnp.int32(~(l_pad - 1))) | (jnp.int32(l_pad - 1) - label)
            if num_labels < l_pad:
                key = jnp.where(label < num_labels, key, jnp.int32(_INT32_MIN))
            for s, m in zip(shifts, masks):
                key = jnp.maximum(key, jnp.where(m, roll_up(key, s), jnp.int32(_INT32_MIN)))
            return jnp.int32(l_pad - 1) - (key & jnp.int32(l_pad - 1))
        else:
            # Exact float32 path: lexicographic (value desc, label asc) suffix reduce.
            v = vals.astype(jnp.float32)
            if num_labels < l_pad:
                v = jnp.where(label < num_labels, v, -jnp.inf)
            idx = label
            for s, m in zip(shifts, masks):
                nv, ni = roll_up(v, s), roll_up(idx, s)
                take = m & ((nv > v) | ((nv == v) & (ni < idx)))
                v = jnp.where(take, nv, v)
                idx = jnp.where(take, ni, idx)
            return idx

    def kernel(e_ref, halo_ref, out_ref):
        lane, label, masks = make_iotas(r_tile)
        row = lax.broadcasted_iota(jnp.int32, (r_tile, _LANES), 0)
        seg = lane >> log2_lpad                           # timestep-within-row index

        # --- 1. per-timestep argmax (valid at segment-start lanes) ---------------------
        idx = seg_argmax(e_ref[...], label, masks)

        # --- 2. previous-timestep argmax: previous segment / previous row / previous tile
        prev = roll_prev(idx, l_pad)                      # previous segment, same row
        is_seg0 = lane < l_pad
        prev = jnp.where(is_seg0, pltpu.roll(prev, shift=1, axis=0), prev)

        # Cross-tile boundary: re-derive the previous tile's last timestep from the small
        # halo block (its last _HALO_ROWS packed rows).  No sequential carry, so the time
        # grid axis runs "parallel" (both v7x TensorCores).  The halo always comes from a
        # fully-valid tile: only the final tile can contain padded timesteps.
        _, label_h, masks_h = make_iotas(_HALO_ROWS)
        halo_idx = seg_argmax(halo_ref[...], label_h, masks_h)
        carry = roll_prev(halo_idx[_HALO_ROWS - 1:_HALO_ROWS, :], l_pad)      # (1, 128)
        carry = jnp.where(pl.program_id(0) == 0, jnp.int32(-1), carry)
        is_first_ts = is_seg0 & (row == 0)
        prev = jnp.where(is_first_ts, jnp.broadcast_to(carry, (r_tile, _LANES)), prev)

        # --- 3. CTC collapse: dedup + drop blanks + mask padded tail timesteps ----------
        t_global = (pl.program_id(0) * r_tile + row) * p + seg
        keep = (idx != jnp.int32(blank)) & (idx != prev) & (t_global < t_valid)

        # --- 4. lane-dense int8 output: argmax label if kept else -1 --------------------
        out_ref[...] = jnp.where(keep, idx, jnp.int32(-1)).astype(jnp.int8)

    return kernel


@functools.partial(jax.jit, static_argnames=("blank", "r_tile_max"))
def greedy_ctc_decode(emission: jax.Array, blank: int = 0, *,
                      r_tile_max: int = _R_TILE_MAX) -> jax.Array:
    """Greedy CTC decode hot path on TPU.

    Args:
      emission: [T, L] logits (bf16/f16 recommended to halve HBM reads; f32 also exact).
      blank:    blank label index.
    Returns:
      int8[T]: per timestep, the argmax label if it survives the CTC collapse
      (unique_consecutive + blank removal), else -1.
    """
    t, l = emission.shape
    if l > _LANES:
        raise NotImplementedError("GreedyCTCDecoder kernel supports num_labels <= 128")

    l_pad = max(1, pl.next_power_of_2(l))   # lanes per timestep segment (divides 128)
    p = _LANES // l_pad                     # timesteps packed per 128-lane row
    rows_needed = pl.cdiv(t, p)
    r_tile = min(_round_up(max(r_tile_max, 1), _HALO_ROWS),
                 _round_up(rows_needed, _HALO_ROWS))       # multiple of 32 (int8 tiling)
    t_tile = r_tile * p
    num_tiles = pl.cdiv(t, t_tile)
    r_total = num_tiles * r_tile
    t_pad = r_total * p

    fused = (emission.dtype.itemsize == 2
             and jnp.issubdtype(emission.dtype, jnp.floating))

    e = emission
    if t_pad > t or l_pad > l:
        # Single fused zero-pad pass; the kernel masks padded labels/timesteps itself.
        e = jnp.pad(e, ((0, t_pad - t), (0, l_pad - l)))
    packed = e.reshape(r_total, _LANES)     # free row-major reshape (no transpose)

    kernel = _make_ctc_kernel(blank=blank, num_labels=l, l_pad=l_pad, p=p,
                              r_tile=r_tile, t_valid=t, fused=fused)
    halo_blocks_per_tile = r_tile // _HALO_ROWS
    itemsize = packed.dtype.itemsize
    out = pl.pallas_call(
        kernel,
        out_shape=jax.ShapeDtypeStruct((r_total, _LANES), jnp.int8),
        grid=(num_tiles,),
        in_specs=[
            pl.BlockSpec((r_tile, _LANES), lambda i: (i, 0)),
            # Halo: last _HALO_ROWS packed rows of the previous tile (clamped at i == 0,
            # where the kernel overrides the carry with -1 anyway).
            pl.BlockSpec((_HALO_ROWS, _LANES),
                         lambda i: (jnp.maximum(i * halo_blocks_per_tile - 1, 0), 0)),
        ],
        out_specs=pl.BlockSpec((r_tile, _LANES), lambda i: (i, 0)),
        compiler_params=pltpu.CompilerParams(
            # No cross-tile carry -> tiles are independent -> shard across TensorCores.
            dimension_semantics=("parallel",),
        ),
        cost_estimate=pl.CostEstimate(
            flops=r_total * _LANES * (12 + 8 * max(1, l_pad.bit_length() - 1)),
            transcendentals=0,
            bytes_accessed=(r_total + num_tiles * _HALO_ROWS) * _LANES * itemsize
                           + r_total * _LANES,
        ),
    )(packed, packed)

    # Segment-start lane of every l_pad-lane segment carries that timestep's value.
    return out.reshape(r_total, p, l_pad)[:, :, 0].reshape(t_pad)[:t]


class GreedyCTCDecoder:
    """JAX/Pallas port of the PyTorch GreedyCTCDecoder (greedy best-path decoding)."""

    def __init__(self, labels, blank: int = 0):
        self.labels = labels
        self.blank = blank

    def __call__(self, emission: jax.Array) -> str:
        ids = greedy_ctc_decode(emission, blank=self.blank)
        ids = np.asarray(jax.device_get(ids))   # device_get already synchronizes
        # TODO(synk): label-index -> character string join has no Pallas equivalent; host glue.
        return "".join(self.labels[int(i)] for i in ids if i >= 0)


def _reference_decode(emission, labels, blank=0) -> str:
    """Pure-numpy reference matching the PyTorch module semantics."""
    e = np.asarray(jax.device_get(emission)).astype(np.float32)
    idx = np.argmax(e, axis=-1)
    keep = np.ones(idx.shape, dtype=bool)
    keep[1:] = idx[1:] != idx[:-1]
    return "".join(labels[int(i)] for i, k in zip(idx, keep) if k and i != blank)


if __name__ == "__main__":
    key = jax.random.PRNGKey(0)
    k1, k2, k3 = jax.random.split(key, 3)

    # Case 1: small f32 demo (single tile, exact float path, tail masking).
    labels8 = ["-", "a", "b", "c", "d", "e", "f", "g"]   # index 0 is the blank token
    dec8 = GreedyCTCDecoder(labels8, blank=0)
    em1 = jax.random.normal(k1, (16, len(labels8)), dtype=jnp.float32)
    ids1 = greedy_ctc_decode(em1, blank=0)
    jax.block_until_ready(ids1)
    assert dec8(em1) == _reference_decode(em1, labels8, blank=0)

    # Case 2: multiple grid steps (f32 path + cross-tile halo dedup), 3 tiles of 512 steps.
    em2 = jax.random.normal(k2, (1200, len(labels8)), dtype=jnp.float32)
    ids2 = greedy_ctc_decode(em2, blank=0, r_tile_max=32)
    jax.block_until_ready(ids2)
    got2 = "".join(labels8[int(i)] for i in np.asarray(jax.device_get(ids2)) if i >= 0)
    assert got2 == _reference_decode(em2, labels8, blank=0)

    # Case 3: realistic 29-label vocab in bf16 (fused packed-key path + label padding),
    # both multi-tile (4 tiles of 128 steps) and default single-tile tiling.
    labels29 = ["-", "|", "'"] + [chr(ord("a") + i) for i in range(26)]
    dec29 = GreedyCTCDecoder(labels29, blank=0)
    em3 = jax.random.normal(k3, (500, len(labels29)), dtype=jnp.float32).astype(jnp.bfloat16)
    ids3 = greedy_ctc_decode(em3, blank=0, r_tile_max=32)
    jax.block_until_ready(ids3)
    got3 = "".join(labels29[int(i)] for i in np.asarray(jax.device_get(ids3)) if i >= 0)
    ref3 = _reference_decode(em3, labels29, blank=0)
    assert got3 == ref3
    assert dec29(em3) == ref3

    print("KERNEL_OK")
</pallas_src>

<mosaic_0001>
module attributes {stable_mosaic.version = 11 : i64} {
  func.func @kernel(%arg0: i32, %arg1: memref<32x128xf32, #tpu.memory_space<vmem>>, %arg2: memref<32x128xf32, #tpu.memory_space<vmem>>, %arg3: memref<32x128xi8, #tpu.memory_space<vmem>>) attributes {dimension_semantics = [#tpu.dimension_semantics<parallel>], iteration_bounds = array<i64: 1>, scalar_prefetch = 0 : i64, scratch_operands = 0 : i64, tpu.core_type = #tpu.core_type<tc>, window_params = [{transform_indices = @transform_0, window_bounds = array<i64: 32, 128>}, {transform_indices = @transform_1, window_bounds = array<i64: 32, 128>}, {transform_indices = @transform_2, window_bounds = array<i64: 32, 128>}]} {
    %0 = tpu.iota {dimensions = array<i32: 1>} : vector<32x128xi32>
    %c7_i32 = arith.constant 7 : i32
    %1 = vector.broadcast %c7_i32 : i32 to vector<32x128xi32>
    %2 = arith.andi %0, %1 : vector<32x128xi32>
    %c1_i32 = arith.constant 1 : i32
    %3 = vector.broadcast %c1_i32 : i32 to vector<32x128xi32>
    %4 = arith.addi %2, %3 : vector<32x128xi32>
    %c8_i32 = arith.constant 8 : i32
    %5 = vector.broadcast %c8_i32 : i32 to vector<32x128xi32>
    %6 = arith.cmpi slt, %4, %5 : vector<32x128xi32>
    %c2_i32 = arith.constant 2 : i32
    %7 = vector.broadcast %c2_i32 : i32 to vector<32x128xi32>
    %8 = arith.addi %2, %7 : vector<32x128xi32>
    %c8_i32_0 = arith.constant 8 : i32
    %9 = vector.broadcast %c8_i32_0 : i32 to vector<32x128xi32>
    %10 = arith.cmpi slt, %8, %9 : vector<32x128xi32>
    %c4_i32 = arith.constant 4 : i32
    %11 = vector.broadcast %c4_i32 : i32 to vector<32x128xi32>
    %12 = arith.addi %2, %11 : vector<32x128xi32>
    %c8_i32_1 = arith.constant 8 : i32
    %13 = vector.broadcast %c8_i32_1 : i32 to vector<32x128xi32>
    %14 = arith.cmpi slt, %12, %13 : vector<32x128xi32>
    %15 = tpu.iota {dimensions = array<i32: 0>} : vector<32x128xi32>
    %c3_i32 = arith.constant 3 : i32
    %16 = vector.broadcast %c3_i32 : i32 to vector<32x128xi32>
    %17 = arith.shrsi %0, %16 : vector<32x128xi32>
    %c0 = arith.constant 0 : index
    %c0_2 = arith.constant 0 : index
    %18 = vector.load %arg1[%c0, %c0_2] : memref<32x128xf32, #tpu.memory_space<vmem>>, vector<32x128xf32>
    %c127_i32 = arith.constant 127 : i32
    %19 = tpu.dynamic_rotate %18 by %c127_i32 dim 1 : vector<32x128xf32>, i32 -> vector<32x128xf32>
    %c127_i32_3 = arith.constant 127 : i32
    %20 = tpu.dynamic_rotate %2 by %c127_i32_3 dim 1 : vector<32x128xi32>, i32 -> vector<32x128xi32>
    %21 = arith.cmpf ogt, %19, %18 : vector<32x128xf32>
    %22 = arith.cmpf oeq, %19, %18 : vector<32x128xf32>
    %23 = arith.cmpi slt, %20, %2 : vector<32x128xi32>
    %24 = arith.andi %22, %23 : vector<32x128xi1>
    %25 = arith.ori %21, %24 : vector<32x128xi1>
    %26 = arith.andi %6, %25 : vector<32x128xi1>
    %27 = arith.select %26, %19, %18 : vector<32x128xi1>, vector<32x128xf32>
    %28 = arith.select %26, %20, %2 : vector<32x128xi1>, vector<32x128xi32>
    %c126_i32 = arith.constant 126 : i32
    %29 = tpu.dynamic_rotate %27 by %c126_i32 dim 1 : vector<32x128xf32>, i32 -> vector<32x128xf32>
    %c126_i32_4 = arith.constant 126 : i32
    %30 = tpu.dynamic_rotate %28 by %c126_i32_4 dim 1 : vector<32x128xi32>, i32 -> vector<32x128xi32>
    %31 = arith.cmpf ogt, %29, %27 : vector<32x128xf32>
    %32 = arith.cmpf oeq, %29, %27 : vector<32x128xf32>
    %33 = arith.cmpi slt, %30, %28 : vector<32x128xi32>
    %34 = arith.andi %32, %33 : vector<32x128xi1>
    %35 = arith.ori %31, %34 : vector<32x128xi1>
    %36 = arith.andi %10, %35 : vector<32x128xi1>
    %37 = arith.select %36, %29, %27 : vector<32x128xi1>, vector<32x128xf32>
    %38 = arith.select %36, %30, %28 : vector<32x128xi1>, vector<32x128xi32>
    %c124_i32 = arith.constant 124 : i32
    %39 = tpu.dynamic_rotate %37 by %c124_i32 dim 1 : vector<32x128xf32>, i32 -> vector<32x128xf32>
    %c124_i32_5 = arith.constant 124 : i32
    %40 = tpu.dynamic_rotate %38 by %c124_i32_5 dim 1 : vector<32x128xi32>, i32 -> vector<32x128xi32>
    %41 = arith.cmpf ogt, %39, %37 : vector<32x128xf32>
    %42 = arith.cmpf oeq, %39, %37 : vector<32x128xf32>
    %43 = arith.cmpi slt, %40, %38 : vector<32x128xi32>
    %44 = arith.andi %42, %43 : vector<32x128xi1>
    %45 = arith.ori %41, %44 : vector<32x128xi1>
    %46 = arith.andi %14, %45 : vector<32x128xi1>
    %47 = arith.select %46, %40, %38 : vector<32x128xi1>, vector<32x128xi32>
    %c8_i32_6 = arith.constant 8 : i32
    %48 = tpu.dynamic_rotate %47 by %c8_i32_6 dim 1 : vector<32x128xi32>, i32 -> vector<32x128xi32>
    %c8_i32_7 = arith.constant 8 : i32
    %49 = vector.broadcast %c8_i32_7 : i32 to vector<32x128xi32>
    %50 = arith.cmpi slt, %0, %49 : vector<32x128xi32>
    %c1_i32_8 = arith.constant 1 : i32
    %51 = tpu.dynamic_rotate %48 by %c1_i32_8 dim 0 : vector<32x128xi32>, i32 -> vector<32x128xi32>
    %52 = arith.select %50, %51, %48 : vector<32x128xi1>, vector<32x128xi32>
    %53 = tpu.iota {dimensions = array<i32: 1>} : vector<32x128xi32>
    %c7_i32_9 = arith.constant 7 : i32
    %54 = vector.broadcast %c7_i32_9 : i32 to vector<32x128xi32>
    %55 = arith.andi %53, %54 : vector<32x128xi32>
    %c1_i32_10 = arith.constant 1 : i32
    %56 = vector.broadcast %c1_i32_10 : i32 to vector<32x128xi32>
    %57 = arith.addi %55, %56 : vector<32x128xi32>
    %c8_i32_11 = arith.constant 8 : i32
    %58 = vector.broadcast %c8_i32_11 : i32 to vector<32x128xi32>
    %59 = arith.cmpi slt, %57, %58 : vector<32x128xi32>
    %c2_i32_12 = arith.constant 2 : i32
    %60 = vector.broadcast %c2_i32_12 : i32 to vector<32x128xi32>
    %61 = arith.addi %55, %60 : vector<32x128xi32>
    %c8_i32_13 = arith.constant 8 : i32
    %62 = vector.broadcast %c8_i32_13 : i32 to vector<32x128xi32>
    %63 = arith.cmpi slt, %61, %62 : vector<32x128xi32>
    %c4_i32_14 = arith.constant 4 : i32
    %64 = vector.broadcast %c4_i32_14 : i32 to vector<32x128xi32>
    %65 = arith.addi %55, %64 : vector<32x128xi32>
    %c8_i32_15 = arith.constant 8 : i32
    %66 = vector.broadcast %c8_i32_15 : i32 to vector<32x128xi32>
    %67 = arith.cmpi slt, %65, %66 : vector<32x128xi32>
    %c0_16 = arith.constant 0 : index
    %c0_17 = arith.constant 0 : index
    %68 = vector.load %arg2[%c0_16, %c0_17] : memref<32x128xf32, #tpu.memory_space<vmem>>, vector<32x128xf32>
    %c127_i32_18 = arith.constant 127 : i32
    %69 = tpu.dynamic_rotate %68 by %c127_i32_18 dim 1 : vector<32x128xf32>, i32 -> vector<32x128xf32>
    %c127_i32_19 = arith.constant 127 : i32
    %70 = tpu.dynamic_rotate %55 by %c127_i32_19 dim 1 : vector<32x128xi32>, i32 -> vector<32x128xi32>
    %71 = arith.cmpf ogt, %69, %68 : vector<32x128xf32>
    %72 = arith.cmpf oeq, %69, %68 : vector<32x128xf32>
    %73 = arith.cmpi slt, %70, %55 : vector<32x128xi32>
    %74 = arith.andi %72, %73 : vector<32x128xi1>
    %75 = arith.ori %71, %74 : vector<32x128xi1>
    %76 = arith.andi %59, %75 : vector<32x128xi1>
    %77 = arith.select %76, %69, %68 : vector<32x128xi1>, vector<32x128xf32>
    %78 = arith.select %76, %70, %55 : vector<32x128xi1>, vector<32x128xi32>
    %c126_i32_20 = arith.constant 126 : i32
    %79 = tpu.dynamic_rotate %77 by %c126_i32_20 dim 1 : vector<32x128xf32>, i32 -> vector<32x128xf32>
    %c126_i32_21 = arith.constant 126 : i32
    %80 = tpu.dynamic_rotate %78 by %c126_i32_21 dim 1 : vector<32x128xi32>, i32 -> vector<32x128xi32>
    %81 = arith.cmpf ogt, %79, %77 : vector<32x128xf32>
    %82 = arith.cmpf oeq, %79, %77 : vector<32x128xf32>
    %83 = arith.cmpi slt, %80, %78 : vector<32x128xi32>
    %84 = arith.andi %82, %83 : vector<32x128xi1>
    %85 = arith.ori %81, %84 : vector<32x128xi1>
    %86 = arith.andi %63, %85 : vector<32x128xi1>
    %87 = arith.select %86, %79, %77 : vector<32x128xi1>, vector<32x128xf32>
    %88 = arith.select %86, %80, %78 : vector<32x128xi1>, vector<32x128xi32>
    %c124_i32_22 = arith.constant 124 : i32
    %89 = tpu.dynamic_rotate %87 by %c124_i32_22 dim 1 : vector<32x128xf32>, i32 -> vector<32x128xf32>
    %c124_i32_23 = arith.constant 124 : i32
    %90 = tpu.dynamic_rotate %88 by %c124_i32_23 dim 1 : vector<32x128xi32>, i32 -> vector<32x128xi32>
    %91 = arith.cmpf ogt, %89, %87 : vector<32x128xf32>
    %92 = arith.cmpf oeq, %89, %87 : vector<32x128xf32>
    %93 = arith.cmpi slt, %90, %88 : vector<32x128xi32>
    %94 = arith.andi %92, %93 : vector<32x128xi1>
    %95 = arith.ori %91, %94 : vector<32x128xi1>
    %96 = arith.andi %67, %95 : vector<32x128xi1>
    %97 = arith.select %96, %90, %88 : vector<32x128xi1>, vector<32x128xi32>
    %98 = vector.extract_strided_slice %97 {offsets = [31, 0], sizes = [1, 128], strides = [1, 1]} : vector<32x128xi32> to vector<1x128xi32>
    %c8_i32_24 = arith.constant 8 : i32
    %99 = tpu.dynamic_rotate %98 by %c8_i32_24 dim 1 : vector<1x128xi32>, i32 -> vector<1x128xi32>
    %c0_i32 = arith.constant 0 : i32
    %100 = arith.cmpi eq, %arg0, %c0_i32 : i32
    %c-1_i32 = arith.constant -1 : i32
    %101 = vector.broadcast %c-1_i32 : i32 to vector<1x128xi32>
    %102 = arith.select %100, %101, %99 : vector<1x128xi32>
    %c0_i32_25 = arith.constant 0 : i32
    %103 = vector.broadcast %c0_i32_25 : i32 to vector<32x128xi32>
    %104 = arith.cmpi eq, %15, %103 : vector<32x128xi32>
    %105 = arith.andi %50, %104 : vector<32x128xi1>
    %106 = vector.shape_cast %102 : vector<1x128xi32> to vector<1x128xi32>
    %107 = vector.broadcast %106 : vector<1x128xi32> to vector<32x128xi32>
    %108 = arith.select %105, %107, %52 : vector<32x128xi1>, vector<32x128xi32>
    %c32_i32 = arith.constant 32 : i32
    %109 = arith.muli %arg0, %c32_i32 : i32
    %110 = vector.broadcast %109 : i32 to vector<32x128xi32>
    %111 = arith.addi %110, %15 : vector<32x128xi32>
    %c16_i32 = arith.constant 16 : i32
    %112 = vector.broadcast %c16_i32 : i32 to vector<32x128xi32>
    %113 = arith.muli %111, %112 : vector<32x128xi32>
    %114 = arith.addi %113, %17 : vector<32x128xi32>
    %c0_i32_26 = arith.constant 0 : i32
    %115 = vector.broadcast %c0_i32_26 : i32 to vector<32x128xi32>
    %116 = arith.cmpi ne, %47, %115 : vector<32x128xi32>
    %117 = arith.cmpi ne, %47, %108 : vector<32x128xi32>
    %118 = arith.andi %116, %117 : vector<32x128xi1>
    %c16_i32_27 = arith.constant 16 : i32
    %119 = vector.broadcast %c16_i32_27 : i32 to vector<32x128xi32>
    %120 = arith.cmpi slt, %114, %119 : vector<32x128xi32>
    %121 = arith.andi %118, %120 : vector<32x128xi1>
    %c-1_i32_28 = arith.constant -1 : i32
    %122 = vector.broadcast %c-1_i32_28 : i32 to vector<32x128xi32>
    %123 = arith.select %121, %47, %122 : vector<32x128xi1>, vector<32x128xi32>
    %124 = arith.trunci %123 : vector<32x128xi32> to vector<32x128xi8>
    %c0_29 = arith.constant 0 : index
    %c0_30 = arith.constant 0 : index
    %125 = vector.load %arg3[%c0_29, %c0_30] : memref<32x128xi8, #tpu.memory_space<vmem>>, vector<32x128xi8>
    tpu.vector_store %arg3[%c0_29, %c0_30], %124 {strides = array<i32>} : memref<32x128xi8, #tpu.memory_space<vmem>>, vector<32x128xi8>,
    return
  }
  func.func @transform_0(%arg0: i32) -> (i32, i32) {
    %c0_i32 = arith.constant 0 : i32
    %c0_i32_0 = arith.constant 0 : i32
    return %arg0, %c0_i32 : i32, i32
  }
  func.func @transform_1(%arg0: i32) -> (i32, i32) {
    %c1_i32 = arith.constant 1 : i32
    %0 = arith.muli %arg0, %c1_i32 : i32
    %c1_i32_0 = arith.constant 1 : i32
    %1 = arith.subi %0, %c1_i32_0 : i32
    %c0_i32 = arith.constant 0 : i32
    %2 = arith.maxsi %1, %c0_i32 : i32
    %c0_i32_1 = arith.constant 0 : i32
    %c0_i32_2 = arith.constant 0 : i32
    return %2, %c0_i32_1 : i32, i32
  }
  func.func @transform_2(%arg0: i32) -> (i32, i32) {
    %c0_i32 = arith.constant 0 : i32
    %c0_i32_0 = arith.constant 0 : i32
    return %arg0, %c0_i32 : i32, i32
  }
}

</mosaic_0001>

<llo_original>
// kernel: greedy_ctc_decode.1
$region0: #{greedy_ctc_decode.1}
  #allocation0 [shape = 'u32[]', space=smem, size = 0x4, offset = 0x4, fixed_abs, tag = 'smem constant byte address 0x4 - core index']
  #allocation1 [shape = 'u32[144,128]{1,0:T(1,128)}', space=vmem, size = 0x12000, scoped, tag = 'internal scratch']
  %s0 = inlined_call_operand.vmem [shape: f32[32,128], index: 0, kind: input, shape index: {}, may-alias: {0,1}]
  %s1 = inlined_call_operand.vmem [shape: f32[32,128], index: 1, kind: input, shape index: {}, may-alias: {0,1}]
  %s2 = inlined_call_operand.vmem [shape: s8[32,128], index: 2, kind: output, shape index: {}]
  %s3 = sld [smem:[#allocation0]]
  $region18: #{greedy_ctc_decode.1} parent=0
    _
  %s5 = ssub.s32 1, %s3
  %s6 = scalar_select 0, %s5, %s3
  // Predicated region
  $region2: #{greedy_ctc_decode.1} parent=0 // pred_check
    _
  $region3: #{greedy_ctc_decode.1} parent=0 // pred_check_branch
    %8 = sbr.rel (0) target = $region5
  $region4: #{greedy_ctc_decode.1} parent=0 // pred_region
    _
  $region5: #{greedy_ctc_decode.1} parent=0 // pred_fallthru
    _
  // Predicated region
  $region6: #{greedy_ctc_decode.1} parent=0 // pred_check
    _
  $region7: #{greedy_ctc_decode.1} parent=0 // pred_check_branch
    %10 = sbr.rel (0) target = $region9
  $region8: #{greedy_ctc_decode.1} parent=0 // pred_region
    %s11 = ssub.s32 0, 1
    %p12 = scmp.gt.s32.totalorder %s11, 0
    %s13 = scalar_select %p12, %s11, 0
    %s14 = smul.u32 4, %s13
    %p15 = scmp.lt.s32.totalorder %s14, 3
    %s16 = scalar_select %p15, %s14, 3
    %s17 = smul.addr %s16, 8
    %s18 = scalar_lea.vmem %s1, %s17
    %s19 = ssub.s32 0, 1
    %p20 = scmp.gt.s32.totalorder %s19, 0
    %s21 = scalar_select %p20, %s19, 0
    %s22 = smul.u32 4, %s21
  $region9: #{greedy_ctc_decode.1} parent=0 // pred_fallthru
    _
  %s23 = ssub.s32 0, 1
  %p24 = scmp.gt.s32.totalorder %s23, 0
  %s25 = scalar_select %p24, %s23, 0
  %s26 = smul.u32 4, %s25
  %p27 = scmp.lt.s32.totalorder %s26, 3
  %s28 = scalar_select %p27, %s26, 3
  %s29 = smul.addr %s28, 8
  %s30 = scalar_lea.vmem %s1, %s29
  %s31 = ssub.s32 0, 1
  %p32 = scmp.gt.s32.totalorder %s31, 0
  %s33 = scalar_select %p32, %s31, 0
  %s34 = smul.u32 4, %s33
  %p35 = scmp.lt.s32.totalorder %s34, 3
  %s36 = scalar_select %p35, %s34, 3
  %s37 = smul.addr %s36, 8
  %s38 = scalar_lea.vmem %s1, %s37
  %s39 = ssub.s32 0, 1
  %p40 = scmp.gt.s32.totalorder %s39, 0
  %s41 = scalar_select %p40, %s39, 0
  %s42 = smul.u32 4, %s41
  %v43 = vlaneseq
  %v44 = vand.u32 %v43, 127
  %v45 = vand.u32 %v44, 7
  %v46 = vadd.s32 %v45, 1
  %vm47 = vcmp.lt.s32.totalorder %v46, 8
  %v48 = vadd.s32 %v45, 2
  %vm49 = vcmp.lt.s32.totalorder %v48, 8
  %v50 = vadd.s32 %v45, 4
  %vm51 = vcmp.lt.s32.totalorder %v50, 8
  %v52 = vlaneseq
  %v53 = vshrl.u32 %v52, 7
  %v54 = vadd.s32 %v53, 8
  %v55 = vadd.s32 %v53, 16
  %v56 = vadd.s32 %v53, 24
  %v57 = vshra.s32 %v44, 3
  %v58 = vld [vmem:[%s0] sm:$0xff]
  %v59 = vld [vmem:[%s0 + $0x8] sm:$0xff]
  %v60 = vld [vmem:[%s0 + $0x10] sm:$0xff]
  %v61 = vld [vmem:[%s0 + $0x18] sm:$0xff]
  %62 = vrot.lane.b32.xlu0 %v58, 127
  %v63 = vpop.permute.xlu0 %62
  %64 = vrot.lane.b32.xlu0 %v59, 127
  %v65 = vpop.permute.xlu0 %64
  %66 = vrot.lane.b32.xlu0 %v60, 127
  %v67 = vpop.permute.xlu0 %66
  %68 = vrot.lane.b32.xlu0 %v61, 127
  %v69 = vpop.permute.xlu0 %68
  %70 = vrot.lane.b32.xlu0 %v45, 127
  %v71 = vpop.permute.xlu0 %70
  %vm72 = vcmp.gt.f32.partialorder %v63, %v58
  %vm73 = vcmp.gt.f32.partialorder %v65, %v59
  %vm74 = vcmp.gt.f32.partialorder %v67, %v60
  %vm75 = vcmp.gt.f32.partialorder %v69, %v61
  %vm76 = vcmp.eq.f32.partialorder %v63, %v58
  %vm77 = vcmp.eq.f32.partialorder %v65, %v59
  %vm78 = vcmp.eq.f32.partialorder %v67, %v60
  %vm79 = vcmp.eq.f32.partialorder %v69, %v61
  %vm80 = vcmp.lt.s32.totalorder %v71, %v45
  %vm81 = vmand %vm76, %vm80
  %vm82 = vmand %vm77, %vm80
  %vm83 = vmand %vm78, %vm80
  %vm84 = vmand %vm79, %vm80
  %vm85 = vmor %vm72, %vm81
  %vm86 = vmor %vm73, %vm82
  %vm87 = vmor %vm74, %vm83
  %vm88 = vmor %vm75, %vm84
  %vm89 = vmand %vm47, %vm85
  %vm90 = vmand %vm47, %vm86
  %vm91 = vmand %vm47, %vm87
  %vm92 = vmand %vm47, %vm88
  %v93 = vsel %vm89, %v63, %v58
  %v94 = vsel %vm90, %v65, %v59
  %v95 = vsel %vm91, %v67, %v60
  %v96 = vsel %vm92, %v69, %v61
  %v97 = vsel %vm89, %v71, %v45
  %v98 = vsel %vm90, %v71, %v45
  %v99 = vsel %vm91, %v71, %v45
  %v100 = vsel %vm92, %v71, %v45
  %101 = vrot.lane.b32.xlu0 %v93, 126
  %v102 = vpop.permute.xlu0 %101
  %103 = vrot.lane.b32.xlu0 %v94, 126
  %v104 = vpop.permute.xlu0 %103
  %105 = vrot.lane.b32.xlu0 %v95, 126
  %v106 = vpop.permute.xlu0 %105
  %107 = vrot.lane.b32.xlu0 %v96, 126
  %v108 = vpop.permute.xlu0 %107
  %109 = vrot.lane.b32.xlu0 %v97, 126
  %v110 = vpop.permute.xlu0 %109
  %111 = vrot.lane.b32.xlu0 %v98, 126
  %v112 = vpop.permute.xlu0 %111
  %113 = vrot.lane.b32.xlu0 %v99, 126
  %v114 = vpop.permute.xlu0 %113
  %115 = vrot.lane.b32.xlu0 %v100, 126
  %v116 = vpop.permute.xlu0 %115
  %vm117 = vcmp.gt.f32.partialorder %v102, %v93
  %vm118 = vcmp.gt.f32.partialorder %v104, %v94
  %vm119 = vcmp.gt.f32.partialorder %v106, %v95
  %vm120 = vcmp.gt.f32.partialorder %v108, %v96
  %vm121 = vcmp.eq.f32.partialorder %v102, %v93
  %vm122 = vcmp.eq.f32.partialorder %v104, %v94
  %vm123 = vcmp.eq.f32.partialorder %v106, %v95
  %vm124 = vcmp.eq.f32.partialorder %v108, %v96
  %vm125 = vcmp.lt.s32.totalorder %v110, %v97
  %vm126 = vcmp.lt.s32.totalorder %v112, %v98
  %vm127 = vcmp.lt.s32.totalorder %v114, %v99
  %vm128 = vcmp.lt.s32.totalorder %v116, %v100
  %vm129 = vmand %vm121, %vm125
  %vm130 = vmand %vm122, %vm126
  %vm131 = vmand %vm123, %vm127
  %vm132 = vmand %vm124, %vm128
  %vm133 = vmor %vm117, %vm129
  %vm134 = vmor %vm118, %vm130
  %vm135 = vmor %vm119, %vm131
  %vm136 = vmor %vm120, %vm132
  %vm137 = vmand %vm49, %vm133
  %vm138 = vmand %vm49, %vm134
  %vm139 = vmand %vm49, %vm135
  %vm140 = vmand %vm49, %vm136
  %v141 = vsel %vm137, %v102, %v93
  %v142 = vsel %vm138, %v104, %v94
  %v143 = vsel %vm139, %v106, %v95
  %v144 = vsel %vm140, %v108, %v96
  %v145 = vsel %vm137, %v110, %v97
  %v146 = vsel %vm138, %v112, %v98
  %v147 = vsel %vm139, %v114, %v99
  %v148 = vsel %vm140, %v116, %v100
  %149 = vrot.lane.b32.xlu0 %v141, 124
  %v150 = vpop.permute.xlu0 %149
  %151 = vrot.lane.b32.xlu0 %v142, 124
  %v152 = vpop.permute.xlu0 %151
  %153 = vrot.lane.b32.xlu0 %v143, 124
  %v154 = vpop.permute.xlu0 %153
  %155 = vrot.lane.b32.xlu0 %v144, 124
  %v156 = vpop.permute.xlu0 %155
  %157 = vrot.lane.b32.xlu0 %v145, 124
  %v158 = vpop.permute.xlu0 %157
  %159 = vrot.lane.b32.xlu0 %v146, 124
  %v160 = vpop.permute.xlu0 %159
  %161 = vrot.lane.b32.xlu0 %v147, 124
  %v162 = vpop.permute.xlu0 %161
  %163 = vrot.lane.b32.xlu0 %v148, 124
  %v164 = vpop.permute.xlu0 %163
  %vm165 = vcmp.gt.f32.partialorder %v150, %v141
  %vm166 = vcmp.gt.f32.partialorder %v152, %v142
  %vm167 = vcmp.gt.f32.partialorder %v154, %v143
  %vm168 = vcmp.gt.f32.partialorder %v156, %v144
  %vm169 = vcmp.eq.f32.partialorder %v150, %v141
  %vm170 = vcmp.eq.f32.partialorder %v152, %v142
  %vm171 = vcmp.eq.f32.partialorder %v154, %v143
  %vm172 = vcmp.eq.f32.partialorder %v156, %v144
  %vm173 = vcmp.lt.s32.totalorder %v158, %v145
  %vm174 = vcmp.lt.s32.totalorder %v160, %v146
  %vm175 = vcmp.lt.s32.totalorder %v162, %v147
  %vm176 = vcmp.lt.s32.totalorder %v164, %v148
  %vm177 = vmand %vm169, %vm173
  %vm178 = vmand %vm170, %vm174
  %vm179 = vmand %vm171, %vm175
  %vm180 = vmand %vm172, %vm176
  %vm181 = vmor %vm165, %vm177
  %vm182 = vmor %vm166, %vm178
  %vm183 = vmor %vm167, %vm179
  %vm184 = vmor %vm168, %vm180
  %vm185 = vmand %vm51, %vm181
  %vm186 = vmand %vm51, %vm182
  %vm187 = vmand %vm51, %vm183
  %vm188 = vmand %vm51, %vm184
  %v189 = vsel %vm185, %v158, %v145
  %v190 = vsel %vm186, %v160, %v146
  %v191 = vsel %vm187, %v162, %v147
  %v192 = vsel %vm188, %v164, %v148
  %193 = vrot.lane.b32.xlu0 %v189, 8
  %v194 = vpop.permute.xlu0 %193
  %195 = vrot.lane.b32.xlu0 %v190, 8
  %v196 = vpop.permute.xlu0 %195
  %197 = vrot.lane.b32.xlu0 %v191, 8
  %v198 = vpop.permute.xlu0 %197
  %199 = vrot.lane.b32.xlu0 %v192, 8
  %v200 = vpop.permute.xlu0 %199
  %vm201 = vcmp.lt.s32.totalorder %v44, 8
  %v202 = vrot.slane %v194, 7
  %v203 = vrot.slane %v196, 7
  %v204 = vrot.slane %v198, 7
  %v205 = vrot.slane %v200, 7
  %vm206 = vcmp.lt.s32.totalorder %v53, 1
  %v207 = vsel %vm206, %v204, %v205
  %v208 = vsel %vm206, %v203, %v204
  %v209 = vsel %vm206, %v202, %v203
  %v210 = vsel %vm206, %v205, %v202
  %v211 = vsel %vm201, %v210, %v194
  %v212 = vsel %vm201, %v209, %v196
  %v213 = vsel %vm201, %v208, %v198
  %v214 = vsel %vm201, %v207, %v200
  %v215 = vld [vmem:[%s38 + $0x18] sm:$0xff]
  %216 = vrot.lane.b32.xlu0 %v215, 127
  %v217 = vpop.permute.xlu0 %216
  %vm218 = vcmp.gt.f32.partialorder %v217, %v215
  %vm219 = vcmp.eq.f32.partialorder %v217, %v215
  %vm220 = vmand %vm219, %vm80
  %vm221 = vmor %vm218, %vm220
  %vm222 = vmand %vm47, %vm221
  %v223 = vsel %vm222, %v217, %v215
  %v224 = vsel %vm222, %v71, %v45
  %225 = vrot.lane.b32.xlu0 %v223, 126
  %v226 = vpop.permute.xlu0 %225
  %227 = vrot.lane.b32.xlu0 %v224, 126
  %v228 = vpop.permute.xlu0 %227
  %vm229 = vcmp.gt.f32.partialorder %v226, %v223
  %vm230 = vcmp.eq.f32.partialorder %v226, %v223
  %vm231 = vcmp.lt.s32.totalorder %v228, %v224
  %vm232 = vmand %vm230, %vm231
  %vm233 = vmor %vm229, %vm232
  %vm234 = vmand %vm49, %vm233
  %v235 = vsel %vm234, %v226, %v223
  %v236 = vsel %vm234, %v228, %v224
  %237 = vrot.lane.b32.xlu0 %v235, 124
  %v238 = vpop.permute.xlu0 %237
  %239 = vrot.lane.b32.xlu0 %v236, 124
  %v240 = vpop.permute.xlu0 %239
  %vm241 = vcmp.gt.f32.partialorder %v238, %v235
  %vm242 = vcmp.eq.f32.partialorder %v238, %v235
  %vm243 = vcmp.lt.s32.totalorder %v240, %v236
  %vm244 = vmand %vm242, %vm243
  %vm245 = vmor %vm241, %vm244
  %vm246 = vmand %vm51, %vm245
  %v247 = vsel %vm246, %v240, %v236
  %v248 = vrot.slane %v247, 7
  %249 = vrot.lane.b32.xlu0 %v248, 8
  %v250 = vpop.permute.xlu0 %249
  %p251 = scmp.eq.s32.totalorder 0, 0
  %s252 = scalar_select %p251, 1, 0
  %v253 = vstv %s252
  %vm254 = vcmp.eq.s32.totalorder %v253, 1
  %v255 = vsel %vm254, 4294967295, %v250
  %vm256 = vcmp.eq.s32.totalorder %v53, 0
  %vm257 = vcmp.eq.s32.totalorder %v54, 0
  %vm258 = vcmp.eq.s32.totalorder %v55, 0
  %vm259 = vcmp.eq.s32.totalorder %v56, 0
  %vm260 = vmand %vm201, %vm256
  %vm261 = vmand %vm201, %vm257
  %vm262 = vmand %vm201, %vm258
  %vm263 = vmand %vm201, %vm259
  %v264 = vlaneseq
  %v265 = vshrl.u32 %v264, 7
  %v266 = vsub.s32 0, %v265
  %v267 = vrot.slane %v255, %v266
  %v268 = vsel %vm260, %v267, %v211
  %v269 = vsel %vm261, %v267, %v212
  %v270 = vsel %vm262, %v267, %v213
  %v271 = vsel %vm263, %v267, %v214
  %s272 = smul.u32 0, 32
  %v273 = vstv %s272
  %v274 = vadd.s32 %v273, %v53
  %v275 = vadd.s32 %v273, %v54
  %v276 = vadd.s32 %v273, %v55
  %v277 = vadd.s32 %v273, %v56
  %v278 = vmul.u32 %v274, 16
  %v279 = vmul.u32 %v275, 16
  %v280 = vmul.u32 %v276, 16
  %v281 = vmul.u32 %v277, 16
  %v282 = vadd.s32 %v278, %v57
  %v283 = vadd.s32 %v279, %v57
  %v284 = vadd.s32 %v280, %v57
  %v285 = vadd.s32 %v281, %v57
  %vm286 = vcmp.ne.s32.totalorder %v189, 0
  %vm287 = vcmp.ne.s32.totalorder %v190, 0
  %vm288 = vcmp.ne.s32.totalorder %v191, 0
  %vm289 = vcmp.ne.s32.totalorder %v192, 0
  %vm290 = vcmp.ne.s32.totalorder %v189, %v268
  %vm291 = vcmp.ne.s32.totalorder %v190, %v269
  %vm292 = vcmp.ne.s32.totalorder %v191, %v270
  %vm293 = vcmp.ne.s32.totalorder %v192, %v271
  %vm294 = vmand %vm286, %vm290
  %vm295 = vmand %vm287, %vm291
  %vm296 = vmand %vm288, %vm292
  %vm297 = vmand %vm289, %vm293
  %vm298 = vcmp.lt.s32.totalorder %v282, 16
  %vm299 = vcmp.lt.s32.totalorder %v283, 16
  %vm300 = vcmp.lt.s32.totalorder %v284, 16
  %vm301 = vcmp.lt.s32.totalorder %v285, 16
  %vm302 = vmand %vm294, %vm298
  %vm303 = vmand %vm295, %vm299
  %vm304 = vmand %vm296, %vm300
  %vm305 = vmand %vm297, %vm301
  %v306 = vsel %vm302, %v189, 4294967295
  %v307 = vsel %vm303, %v190, 4294967295
  %v308 = vsel %vm304, %v191, 4294967295
  %v309 = vsel %vm305, %v192, 4294967295
  %v310 = vpack.c.b16 %v306, %v306
  %v311 = vpack.c.b8 %v310, %v310
  %v312 = vpack.c.b16 %v307, %v307
  %v313 = vpack.c.b8 %v312, %v312
  %v314 = vpack.c.b16 %v308, %v308
  %v315 = vpack.c.b8 %v314, %v314
  %v316 = vpack.c.b16 %v309, %v309
  %v317 = vpack.c.b8 %v316, %v316
  %318 = vst [vmem:[%s2] sm:$0x3] %v311
  %319 = vst [vmem:[%s2 + $0x2] sm:$0x3] %v313
  %320 = vst [vmem:[%s2 + $0x4] sm:$0x3] %v315
  %321 = vst [vmem:[%s2 + $0x6] sm:$0x3] %v317
  // Predicated region
  $region10: #{greedy_ctc_decode.1} parent=0 // pred_check
    _
  $region11: #{greedy_ctc_decode.1} parent=0 // pred_check_branch
    %323 = sbr.rel (0) target = $region13
  $region12: #{greedy_ctc_decode.1} parent=0 // pred_region
    _
  $region13: #{greedy_ctc_decode.1} parent=0 // pred_fallthru
    _
  // Predicated region
  $region14: #{greedy_ctc_decode.1} parent=0 // pred_check
    _
  $region15: #{greedy_ctc_decode.1} parent=0 // pred_check_branch
    %325 = sbr.rel (0) target = $region17
  $region16: #{greedy_ctc_decode.1} parent=0 // pred_region
    _
  $region17: #{greedy_ctc_decode.1} parent=0 // pred_fallthru
    _

</llo_original>
